<compile_context>
chip_gen: v7x
topology: tpu7x:2x2x1
jax: 0.10.0
libtpu: 0.0.40
codegen_flags: <defaults>
</compile_context>

<pallas_src>
import functools

import jax
import jax.numpy as jnp
from jax.experimental import pallas as pl
from jax.experimental.pallas import tpu as pltpu


# ----------------------------- tiling helper --------------------------------------------------

def _row_tile(M, target=512):
    """Row-tile size + grid length. target is a multiple of 8 so blocks stay (8,128)-legal."""
    if M <= target:
        return M, 1
    return target, pl.cdiv(M, target)


_PAR1 = pltpu.CompilerParams(dimension_semantics=("parallel",))


# ----------------------------- row-tiled linear kernels ---------------------------------------

def _linear_kernel(x_ref, w_ref, b_ref, o_ref, *, relu):
    y = jnp.dot(x_ref[...], w_ref[...], preferred_element_type=jnp.float32) + b_ref[...]
    if relu:
        y = jnp.maximum(y, 0.0)
    o_ref[...] = y.astype(o_ref.dtype)


def _linear_add_kernel(x_ref, w_ref, b_ref, a_ref, o_ref, *, relu):
    y = (jnp.dot(x_ref[...], w_ref[...], preferred_element_type=jnp.float32)
         + b_ref[...] + a_ref[...])
    if relu:
        y = jnp.maximum(y, 0.0)
    o_ref[...] = y.astype(o_ref.dtype)


def pallas_linear(x, w, b, add=None, relu=False, row_tile=512):
    """y = relu?(x @ w + b (+ add)).  x:(M,K) w:(K,N) b:(N,) add:(M,N).  Row-tiled grid."""
    M, K = x.shape
    N = w.shape[1]
    TM, G = _row_tile(M, row_tile)
    b2 = b.reshape(1, N).astype(jnp.float32)
    row = lambda i: (i, 0)
    full = lambda i: (0, 0)
    x_spec = pl.BlockSpec((TM, K), row)
    w_spec = pl.BlockSpec((K, N), full)
    b_spec = pl.BlockSpec((1, N), full)
    o_spec = pl.BlockSpec((TM, N), row)
    out_shape = jax.ShapeDtypeStruct((M, N), jnp.float32)
    if add is None:
        return pl.pallas_call(
            functools.partial(_linear_kernel, relu=relu),
            out_shape=out_shape, grid=(G,),
            in_specs=[x_spec, w_spec, b_spec], out_specs=o_spec,
            compiler_params=_PAR1)(x, w, b2)
    a_spec = pl.BlockSpec((TM, N), row)
    return pl.pallas_call(
        functools.partial(_linear_add_kernel, relu=relu),
        out_shape=out_shape, grid=(G,),
        in_specs=[x_spec, w_spec, b_spec, a_spec], out_specs=o_spec,
        compiler_params=_PAR1)(x, w, b2, add)


def _side_add_kernel(x_ref, w_ref, b_ref, t_ref, xo_ref, to_ref):
    xn = jnp.dot(x_ref[...], w_ref[...], preferred_element_type=jnp.float32) + b_ref[...]
    xo_ref[...] = xn.astype(xo_ref.dtype)
    to_ref[...] = (t_ref[...] + xn).astype(to_ref.dtype)


def pallas_side_add(x, w, b, t, row_tile=512):
    """Fused side conv + residual-stream add: returns (x@w+b, t + (x@w+b))."""
    M, K = x.shape
    N = w.shape[1]
    TM, G = _row_tile(M, row_tile)
    b2 = b.reshape(1, N).astype(jnp.float32)
    row = lambda i: (i, 0)
    full = lambda i: (0, 0)
    return pl.pallas_call(
        _side_add_kernel,
        out_shape=(jax.ShapeDtypeStruct((M, N), jnp.float32),
                   jax.ShapeDtypeStruct((M, N), jnp.float32)),
        grid=(G,),
        in_specs=[pl.BlockSpec((TM, K), row), pl.BlockSpec((K, N), full),
                  pl.BlockSpec((1, N), full), pl.BlockSpec((TM, N), row)],
        out_specs=(pl.BlockSpec((TM, N), row), pl.BlockSpec((TM, N), row)),
        compiler_params=_PAR1)(x, w, b2, t)


def _mix3_kernel(t_ref, h1_ref, h2_ref, wt_ref, w1_ref, w2_ref, b_ref, o_ref):
    y = (jnp.dot(t_ref[...], wt_ref[...], preferred_element_type=jnp.float32)
         + jnp.dot(h1_ref[...], w1_ref[...], preferred_element_type=jnp.float32)
         + jnp.dot(h2_ref[...], w2_ref[...], preferred_element_type=jnp.float32)
         + b_ref[...])
    o_ref[...] = y.astype(o_ref.dtype)


def pallas_mix3(t, h1, h2, w, b, row_tile=512):
    """(concat([t,h1,h2],-1) @ w + b) without materializing the concat.  w:(3C, Cout)."""
    M, C = t.shape
    Cout = w.shape[1]
    wt, w1, w2 = w[:C], w[C:2 * C], w[2 * C:3 * C]
    TM, G = _row_tile(M, row_tile)
    b2 = b.reshape(1, Cout).astype(jnp.float32)
    row = lambda i: (i, 0)
    full = lambda i: (0, 0)
    return pl.pallas_call(
        _mix3_kernel,
        out_shape=jax.ShapeDtypeStruct((M, Cout), jnp.float32),
        grid=(G,),
        in_specs=[pl.BlockSpec((TM, C), row), pl.BlockSpec((TM, C), row),
                  pl.BlockSpec((TM, C), row),
                  pl.BlockSpec((C, Cout), full), pl.BlockSpec((C, Cout), full),
                  pl.BlockSpec((C, Cout), full), pl.BlockSpec((1, Cout), full)],
        out_specs=pl.BlockSpec((TM, Cout), row),
        compiler_params=_PAR1)(t, h1, h2, wt, w1, w2, b2)


# ----------------------------- fused causal dilated temporal conv -----------------------------

def _tconv_kernel(xp_ref, w_ref, b_ref, o_ref, *, K, dilation, T):
    NB = o_ref.shape[0]
    Cin = xp_ref.shape[2]
    Cout = o_ref.shape[2]
    acc = jnp.zeros((NB * T, Cout), jnp.float32)
    for k in range(K):                                  # K shifted taps, all in VMEM
        s = k * dilation
        xs = xp_ref[:, s:s + T, :]                      # (NB, T, Cin) shifted window
        acc = acc + jnp.dot(xs.reshape(NB * T, Cin), w_ref[k],
                            preferred_element_type=jnp.float32)
    y = jnp.maximum(acc + b_ref[...], 0.0)              # conv bias + ReLU
    o_ref[...] = y.reshape(NB, T, Cout).astype(o_ref.dtype)


def pallas_tconv(x_cl, w, b, dilation, node_tile=128):
    """TConv1d: causal dilated temporal conv + ReLU (dropout identity).  x_cl: (B,N,T,Cin)."""
    B, N, T, Cin = x_cl.shape
    K, _, Cout = w.shape
    pad = (K - 1) * dilation
    BN = B * N
    xp = jnp.pad(x_cl.reshape(BN, T, Cin), ((0, 0), (pad, 0), (0, 0)))   # tiny causal pad
    Tpad = T + pad
    NB = min(BN, node_tile)
    G = pl.cdiv(BN, NB)
    b2 = b.reshape(1, Cout).astype(jnp.float32)
    out = pl.pallas_call(
        functools.partial(_tconv_kernel, K=K, dilation=dilation, T=T),
        out_shape=jax.ShapeDtypeStruct((BN, T, Cout), jnp.float32),
        grid=(G,),
        in_specs=[pl.BlockSpec((NB, Tpad, Cin), lambda i: (i, 0, 0)),
                  pl.BlockSpec((K, Cin, Cout), lambda i: (0, 0, 0)),
                  pl.BlockSpec((1, Cout), lambda i: (0, 0))],
        out_specs=pl.BlockSpec((NB, T, Cout), lambda i: (i, 0, 0)),
        compiler_params=_PAR1)(xp, w, b2)
    return out.reshape(B, N, T, Cout)


# ----------------------------- fused graph-aggregation hops -----------------------------------

def _ga_hop_kernel(ctx_ref, mask_ref, adj_ref, adjT_ref, h1_ref, h2_ref, *, T, C):
    TC = T * C
    ctx = ctx_ref[0]                                   # (Nn, T*C)  time-flattened context
    mask = mask_ref[0]                                 # (Nn, T)
    adj = adj_ref[0]                                   # (Nn, Nm)
    adjT = adjT_ref[0]                                 # (Nm, Nn)
    # Expand mask (Nn,T) -> (Nn,T*C) with a tiny MXU matmul (avoids in-kernel lane reshapes).
    j = jax.lax.broadcasted_iota(jnp.int32, (T, TC), 1)
    tC = jax.lax.broadcasted_iota(jnp.int32, (T, TC), 0) * C
    expand = ((j >= tC) & (j < tC + C)).astype(jnp.float32)           # E[t, t*C+c] = 1
    ctx_m = ctx * jnp.dot(mask, expand, preferred_element_type=jnp.float32)
    h1 = jnp.dot(adjT, ctx_m, preferred_element_type=jnp.float32)     # hop 1: context -> target
    back = jnp.dot(adj, h1, preferred_element_type=jnp.float32)       # target -> context
    h2 = jnp.dot(adjT, back, preferred_element_type=jnp.float32)      # hop 2: back to target
    h1_ref[0] = h1.astype(h1_ref.dtype)
    h2_ref[0] = h2.astype(h2_ref.dtype)


def pallas_ga_hops(ctx_flat, mask2, adj, adjT, T, C):
    """Masked two-hop bipartite propagation, fused per batch element (all hops stay in VMEM)."""
    B, Nn, TC = ctx_flat.shape
    Nm = adj.shape[2]
    blk = lambda i: (i, 0, 0)
    return pl.pallas_call(
        functools.partial(_ga_hop_kernel, T=T, C=C),
        out_shape=(jax.ShapeDtypeStruct((B, Nm, TC), jnp.float32),
                   jax.ShapeDtypeStruct((B, Nm, TC), jnp.float32)),
        grid=(B,),
        in_specs=[pl.BlockSpec((1, Nn, TC), blk),
                  pl.BlockSpec((1, Nn, T), blk),
                  pl.BlockSpec((1, Nn, Nm), blk),
                  pl.BlockSpec((1, Nm, Nn), blk)],
        out_specs=(pl.BlockSpec((1, Nm, TC), blk), pl.BlockSpec((1, Nm, TC), blk)),
        compiler_params=_PAR1)(ctx_flat, mask2, adj, adjT)


# ----------------------------- module pieces (thin JAX glue) ----------------------------------

def conv1x1(x_cl, p, add=None, relu=False):
    """Pointwise conv (Conv1d_with_init, kernel_size=1).  x_cl: (B, N, T, Cin)."""
    B, N, T, Cin = x_cl.shape
    Cout = p["w"].shape[1]
    x2 = x_cl.reshape(B * N * T, Cin)
    add2 = None if add is None else add.reshape(B * N * T, Cout)
    y = pallas_linear(x2, p["w"], p["b"], add=add2, relu=relu)
    return y.reshape(B, N, T, Cout)


def side_encode_add(x_cl, p, tgt_cl):
    """Fused: x_new = conv1x1(x_cl); tgt_new = tgt_cl + x_new  (one kernel, two outputs)."""
    B, N, T, Cin = x_cl.shape
    Cout = p["w"].shape[1]
    xn, tn = pallas_side_add(x_cl.reshape(B * N * T, Cin), p["w"], p["b"],
                             tgt_cl.reshape(B * N * T, Cout))
    return xn.reshape(B, N, T, Cout), tn.reshape(B, N, T, Cout)


def graph_aggregation(context_cl, target_cl, adj, adjT, mask2, p):
    """GraphAggregation(order=2): masked bipartite context->target propagation + mixing conv.

    context_cl: (B, Nn, T, C), target_cl: (B, Nm, T, C), adj: (B, Nn, Nm), mask2: (B, Nn, T).
    NOTE: the second hop uses the unmasked intermediate (same assumption as the prior version).
    """
    B, Nn, T, C = context_cl.shape
    Nm = target_cl.shape[1]
    Cout = p["w"].shape[1]
    ctx_flat = context_cl.reshape(B, Nn, T * C)                  # contiguous -> free reshape
    h1, h2 = pallas_ga_hops(ctx_flat, mask2, adj, adjT, T, C)
    t2 = target_cl.reshape(B * Nm * T, C)
    h1_2 = h1.reshape(B * Nm * T, C)                             # free reshapes (contiguous)
    h2_2 = h2.reshape(B * Nm * T, C)
    out = pallas_mix3(t2, h1_2, h2_2, p["w"], p["b"])            # concat-free mixing conv
    return out.reshape(B, Nm, T, Cout)


# ----------------------------- parameter init --------------------------------------------------

def _init_linear(key, cin, cout):
    kw, kb = jax.random.split(key)
    w = jax.random.normal(kw, (cin, cout), jnp.float32) * (2.0 / cin) ** 0.5
    b = jax.random.normal(kb, (cout,), jnp.float32) * 0.01
    return {"w": w, "b": b}


def _init_tconv(key, cin, cout, k):
    kw, kb = jax.random.split(key)
    w = jax.random.normal(kw, (k, cin, cout), jnp.float32) * (2.0 / (k * cin)) ** 0.5
    b = jax.random.normal(kb, (cout,), jnp.float32) * 0.01
    return {"w": w, "b": b}


def init_deterministic_params(key, input_dim, covariate_dim, emd_channel,
                              tcn_channels, tcn_kernel_size):
    tcn_full = [emd_channel] + list(tcn_channels)
    side = [covariate_dim] + list(tcn_channels)
    n_layers = len(tcn_channels)
    keys = iter(jax.random.split(key, 1 + 4 * n_layers))
    return {
        "feature_embedding": _init_linear(next(keys), input_dim, emd_channel),
        "graph_agg": [_init_linear(next(keys), 3 * tcn_full[i], tcn_full[i])
                      for i in range(n_layers)],
        "tcn": [_init_tconv(next(keys), tcn_full[i], tcn_full[i + 1], tcn_kernel_size)
                for i in range(n_layers)],
        "side": [_init_linear(next(keys), side[i], side[i + 1]) for i in range(n_layers)],
        "residual": [_init_linear(next(keys), tcn_full[i], tcn_full[i + 1])
                     for i in range(n_layers)],
        "empty_token": jnp.zeros((1, 1, 1, 1), jnp.float32),
    }


# ----------------------------- Deterministic.forward ------------------------------------------

def deterministic_forward(params, x_context, y_context, x_target, y_target, adj,
                          missing_mask_context, tcn_channels):
    # PyTorch layout (B, nodes, C, T) -> kernel layout (B, nodes, T, C).
    to_cl = lambda z: None if z is None else jnp.swapaxes(z, 2, 3)
    from_cl = lambda z: jnp.swapaxes(z, 2, 3)

    b, num_n, dy, t = y_context.shape
    num_m = adj.shape[2]

    context = to_cl(y_context)
    if y_target is None:
        target = to_cl(jnp.broadcast_to(params["empty_token"], (b, num_m, 1, t)))
    else:
        target = to_cl(y_target)
    xc = to_cl(x_context)
    xt = to_cl(x_target)
    mask2 = jnp.squeeze(missing_mask_context, axis=2).astype(jnp.float32)   # (B, num_n, T)
    adjT = jnp.swapaxes(adj, 1, 2)                                          # (B, num_m, num_n)

    target = conv1x1(target, params["feature_embedding"])
    context = conv1x1(context, params["feature_embedding"])

    d_t, d_c = [], []
    for i in range(len(tcn_channels)):
        target_resi = target
        context_resi = context
        target = graph_aggregation(context, target, adj, adjT, mask2, params["graph_agg"][i])
        target = pallas_tconv(target, params["tcn"][i]["w"], params["tcn"][i]["b"], 2 ** i)
        context = pallas_tconv(context, params["tcn"][i]["w"], params["tcn"][i]["b"], 2 ** i)
        if xt is not None:
            xt, target = side_encode_add(xt, params["side"][i], target)
            xc, context = side_encode_add(xc, params["side"][i], context)
        if i > 0:
            # relu(target + residual(target_resi)) — fused into the row-tiled linear kernel.
            target = conv1x1(target_resi, params["residual"][i], add=target, relu=True)
            context = conv1x1(context_resi, params["residual"][i], add=context, relu=True)
        d_t.append(target)
        d_c.append(context)

    return [from_cl(c) for c in d_c], [from_cl(tg) for tg in d_t]


# ----------------------------- demo -------------------------------------------------------------

if __name__ == "__main__":
    key = jax.random.PRNGKey(0)
    input_dim, covariate_dim, emd_channel = 1, 3, 8
    tcn_channels, tcn_kernel_size, dropout = [16, 16], 2, 0.1
    b, num_n, num_m, t = 2, 4, 3, 16

    pkey, dkey = jax.random.split(key)
    params = init_deterministic_params(pkey, input_dim, covariate_dim, emd_channel,
                                       tcn_channels, tcn_kernel_size)

    ks = jax.random.split(dkey, 6)
    x_context = jax.random.normal(ks[0], (b, num_n, covariate_dim, t), jnp.float32)
    y_context = jax.random.normal(ks[1], (b, num_n, input_dim, t), jnp.float32)
    x_target = jax.random.normal(ks[2], (b, num_m, covariate_dim, t), jnp.float32)
    y_target = jax.random.normal(ks[3], (b, num_m, input_dim, t), jnp.float32)
    adj = jax.nn.softmax(jax.random.normal(ks[4], (b, num_n, num_m), jnp.float32), axis=1)
    missing_mask_context = (jax.random.uniform(ks[5], (b, num_n, 1, t)) > 0.2).astype(jnp.float32)

    d_c, d_t = deterministic_forward(params, x_context, y_context, x_target, y_target,
                                     adj, missing_mask_context, tcn_channels)
    jax.block_until_ready((d_c, d_t))

    assert len(d_c) == len(tcn_channels) and len(d_t) == len(tcn_channels)
    assert d_c[-1].shape == (b, num_n, tcn_channels[-1], t)
    assert d_t[-1].shape == (b, num_m, tcn_channels[-1], t)
    print("KERNEL_OK")
</pallas_src>

<mosaic_0001>
module attributes {stable_mosaic.version = 11 : i64} {
  func.func @_linear_kernel(%arg0: i32, %arg1: memref<96x1xf32, #tpu.memory_space<vmem>>, %arg2: memref<1x8xf32, #tpu.memory_space<vmem>>, %arg3: memref<1x8xf32, #tpu.memory_space<vmem>>, %arg4: memref<96x8xf32, #tpu.memory_space<vmem>>) attributes {dimension_semantics = [#tpu.dimension_semantics<parallel>], iteration_bounds = array<i64: 1>, scalar_prefetch = 0 : i64, scratch_operands = 0 : i64, tpu.core_type = #tpu.core_type<tc>, window_params = [{transform_indices = @transform_0, window_bounds = array<i64: 96, 1>}, {pipeline_mode = #tpu.pipeline_mode<synchronous>, transform_indices = @transform_1, window_bounds = array<i64: 1, 8>}, {pipeline_mode = #tpu.pipeline_mode<synchronous>, transform_indices = @transform_2, window_bounds = array<i64: 1, 8>}, {transform_indices = @transform_3, window_bounds = array<i64: 96, 8>}]} {
    %c0 = arith.constant 0 : index
    %c0_0 = arith.constant 0 : index
    %0 = vector.load %arg1[%c0, %c0_0] : memref<96x1xf32, #tpu.memory_space<vmem>>, vector<96x1xf32>
    %c0_1 = arith.constant 0 : index
    %c0_2 = arith.constant 0 : index
    %1 = vector.load %arg2[%c0_1, %c0_2] : memref<1x8xf32, #tpu.memory_space<vmem>>, vector<1x8xf32>
    %cst = arith.constant dense<0.000000e+00> : vector<96x8xf32>
    %2 = tpu.matmul %0, %1, %cst {dimension_numbers = #tpu.dot_dimension_numbers<[1], [0], [0], [1], [0, 0, 1, 1], [], []>} : vector<96x1xf32>, vector<1x8xf32>, vector<96x8xf32> -> vector<96x8xf32>
    %c0_3 = arith.constant 0 : index
    %c0_4 = arith.constant 0 : index
    %3 = vector.load %arg3[%c0_3, %c0_4] : memref<1x8xf32, #tpu.memory_space<vmem>>, vector<1x8xf32>
    %4 = vector.broadcast %3 : vector<1x8xf32> to vector<96x8xf32>
    %5 = arith.addf %2, %4 : vector<96x8xf32>
    %c0_5 = arith.constant 0 : index
    %c0_6 = arith.constant 0 : index
    %6 = vector.load %arg4[%c0_5, %c0_6] : memref<96x8xf32, #tpu.memory_space<vmem>>, vector<96x8xf32>
    tpu.vector_store %arg4[%c0_5, %c0_6], %5 {strides = array<i32>} : memref<96x8xf32, #tpu.memory_space<vmem>>, vector<96x8xf32>,
    return
  }
  func.func @transform_0(%arg0: i32) -> (i32, i32) {
    %c0_i32 = arith.constant 0 : i32
    %c0_i32_0 = arith.constant 0 : i32
    return %arg0, %c0_i32 : i32, i32
  }
  func.func @transform_1(%arg0: i32) -> (i32, i32) {
    %c0_i32 = arith.constant 0 : i32
    %c0_i32_0 = arith.constant 0 : i32
    %c0_i32_1 = arith.constant 0 : i32
    return %c0_i32, %c0_i32_0 : i32, i32
  }
  func.func @transform_2(%arg0: i32) -> (i32, i32) {
    %c0_i32 = arith.constant 0 : i32
    %c0_i32_0 = arith.constant 0 : i32
    %c0_i32_1 = arith.constant 0 : i32
    return %c0_i32, %c0_i32_0 : i32, i32
  }
  func.func @transform_3(%arg0: i32) -> (i32, i32) {
    %c0_i32 = arith.constant 0 : i32
    %c0_i32_0 = arith.constant 0 : i32
    return %arg0, %c0_i32 : i32, i32
  }
}

</mosaic_0001>

<llo_original>
// kernel: tpu_custom_call.1
$region0: #{tpu_custom_call.1}
  #allocation0 [shape = 'u32[]', space=smem, size = 0x4, offset = 0x4, fixed_abs, tag = 'smem constant byte address 0x4 - core index']
  #allocation1 [shape = 'u32[144,128]{1,0:T(1,128)}', space=vmem, size = 0x12000, scoped, tag = 'internal scratch']
  %s0 = inlined_call_operand.vmem [shape: f32[96,1], index: 0, kind: input, shape index: {}]
  %s1 = inlined_call_operand.vmem [shape: f32[1,8], index: 1, kind: input, shape index: {}]
  %s2 = inlined_call_operand.vmem [shape: f32[1,8], index: 2, kind: input, shape index: {}]
  %s3 = inlined_call_operand.vmem [shape: f32[96,8], index: 3, kind: output, shape index: {}]
  %s4 = sld [smem:[#allocation0]]
  $region22: #{tpu_custom_call.1} parent=0
    _
  %s6 = ssub.s32 1, %s4
  %s7 = scalar_select 0, %s6, %s4
  // Predicated region
  $region2: #{tpu_custom_call.1} parent=0 // pred_check
    _
  $region3: #{tpu_custom_call.1} parent=0 // pred_check_branch
    %9 = sbr.rel (0) target = $region5
  $region4: #{tpu_custom_call.1} parent=0 // pred_region
    _
  $region5: #{tpu_custom_call.1} parent=0 // pred_fallthru
    _
  // Predicated region
  $region6: #{tpu_custom_call.1} parent=0 // pred_check
    _
  $region7: #{tpu_custom_call.1} parent=0 // pred_check_branch
    %11 = sbr.rel (0) target = $region9
  $region8: #{tpu_custom_call.1} parent=0 // pred_region
    _
  $region9: #{tpu_custom_call.1} parent=0 // pred_fallthru
    _
  // Predicated region
  $region10: #{tpu_custom_call.1} parent=0 // pred_check
    _
  $region11: #{tpu_custom_call.1} parent=0 // pred_check_branch
    %13 = sbr.rel (0) target = $region13
  $region12: #{tpu_custom_call.1} parent=0 // pred_region
    _
  $region13: #{tpu_custom_call.1} parent=0 // pred_fallthru
    _
  %v14 = vld [vmem:[%s0] sm:$0xff]
  %v15 = vld [vmem:[%s0 + $0x8] sm:$0xff]
  %v16 = vld [vmem:[%s0 + $0x10] sm:$0xff]
  %v17 = vld [vmem:[%s0 + $0x18] sm:$0xff]
  %v18 = vld [vmem:[%s0 + $0x20] sm:$0xff]
  %v19 = vld [vmem:[%s0 + $0x28] sm:$0xff]
  %v20 = vld [vmem:[%s0 + $0x30] sm:$0xff]
  %v21 = vld [vmem:[%s0 + $0x38] sm:$0xff]
  %v22 = vld [vmem:[%s0 + $0x40] sm:$0xff]
  %v23 = vld [vmem:[%s0 + $0x48] sm:$0xff]
  %v24 = vld [vmem:[%s0 + $0x50] sm:$0xff]
  %v25 = vld [vmem:[%s0 + $0x58] sm:$0xff]
  %v26 = vld [vmem:[%s1] sm:$0x1]
  %v27 = vld [vmem:[%s2] sm:$0x1]
  %v29 = vlaneseq
  %v30 = vshrl.u32 %v29, 7
  %v31 = vsub.s32 0, %v30
  %v32 = vrot.slane %v27, %v31
  %vm34 = vcmask 7168
  %v36 = vsel %vm34, %v14, 0
  %v39 = vsel %vm34, %v15, 0
  %v42 = vsel %vm34, %v16, 0
  %v45 = vsel %vm34, %v17, 0
  %v48 = vsel %vm34, %v18, 0
  %v51 = vsel %vm34, %v19, 0
  %v54 = vsel %vm34, %v20, 0
  %v57 = vsel %vm34, %v21, 0
  %v60 = vsel %vm34, %v22, 0
  %v63 = vsel %vm34, %v23, 0
  %v66 = vsel %vm34, %v24, 0
  %v69 = vsel %vm34, %v25, 0
  %vm71 = vcmask 1040384
  %v73 = vsel %vm71, %v26, 0
  %75 = vmatprep.subr.mxu0 0.0
  %76 = vmatpush1.msra.mxu0 %v73
  %77 = vmatprep.subr.mxu0 0.0
  %78 = vmatpush1.msra.mxu0 0.0
  %79 = vmatprep.subr.mxu0 0.0
  %80 = vmatpush1.msra.mxu0 0.0
  %81 = vmatprep.subr.mxu0 0.0
  %82 = vmatpush1.msra.mxu0 0.0
  %83 = vmatprep.subr.mxu0 0.0
  %84 = vmatpush1.msra.mxu0 0.0
  %85 = vmatprep.subr.mxu0 0.0
  %86 = vmatpush1.msra.mxu0 0.0
  %87 = vmatprep.subr.mxu0 0.0
  %88 = vmatpush1.msra.mxu0 0.0
  %89 = vmatprep.subr.mxu0 0.0
  %90 = vmatpush1.msra.mxu0 0.0
  %91 = vmatprep.subr.mxu0 0.0
  %92 = vmatpush1.msra.mxu0 0.0
  %93 = vmatprep.subr.mxu0 0.0
  %94 = vmatpush1.msra.mxu0 0.0
  %95 = vmatprep.subr.mxu0 0.0
  %96 = vmatpush1.msra.mxu0 0.0
  %97 = vmatprep.subr.mxu0 0.0
  %98 = vmatpush1.msra.mxu0 0.0
  %99 = vmatprep.subr.mxu0 0.0
  %100 = vmatpush1.msra.mxu0 0.0
  %101 = vmatprep.subr.mxu0 0.0
  %102 = vmatpush1.msra.mxu0 0.0
  %103 = vmatprep.subr.mxu0 0.0
  %104 = vmatpush1.msra.mxu0 0.0
  %105 = vmatprep.subr.mxu0 0.0
  %106 = vmatpush1.msra.mxu0 0.0
  %107 = vmatprep.subr.mxu0 0.0
  %108 = vmatpush1.msra.mxu0 0.0
  %109 = vmatprep.subr.mxu0 0.0
  %110 = vmatpush1.msra.mxu0 0.0
  %111 = vmatprep.subr.mxu0 0.0
  %112 = vmatpush1.msra.mxu0 0.0
  %113 = vmatprep.subr.mxu0 0.0
  %114 = vmatpush1.msra.mxu0 0.0
  %115 = vmatprep.subr.mxu0 0.0
  %116 = vmatpush1.msra.mxu0 0.0
  %117 = vmatprep.subr.mxu0 0.0
  %118 = vmatpush1.msra.mxu0 0.0
  %119 = vmatprep.subr.mxu0 0.0
  %120 = vmatpush1.msra.mxu0 0.0
  %121 = vmatprep.subr.mxu0 0.0
  %122 = vmatpush1.msra.mxu0 0.0
  %123 = vmatprep.subr.mxu0 0.0
  %124 = vmatpush1.msra.mxu0 0.0
  %125 = vmatprep.subr.mxu0 0.0
  %126 = vmatpush1.msra.mxu0 0.0
  %127 = vmatprep.subr.mxu0 0.0
  %128 = vmatpush1.msra.mxu0 0.0
  %129 = vmatprep.subr.mxu0 0.0
  %130 = vmatpush1.msra.mxu0 0.0
  %131 = vmatprep.subr.mxu0 0.0
  %132 = vmatpush1.msra.mxu0 0.0
  %133 = vmatprep.subr.mxu0 0.0
  %134 = vmatpush1.msra.mxu0 0.0
  %135 = vmatprep.subr.mxu0 0.0
  %136 = vmatpush1.msra.mxu0 0.0
  %137 = vmatprep.subr.mxu0 0.0
  %138 = vmatpush1.msra.mxu0 0.0
  %139 = vmatprep.mubr.f32.mxu0 0.0
  %140 = vmatmul.mubr.f32.gmra.mrb[0].mxu0 %v36
  %v141 = vpop.f32.mrb[0].mxu0
  %v142 = vadd.f32 %v32, %v141
  %v143 = vpop.f32.mrb[0].mxu0
  %144 = vmatprep.mubr.f32.mxu0 0.0
  %145 = vmatmul.mubr.f32.gmra.mrb[0].mxu0 %v39
  %v146 = vpop.f32.mrb[0].mxu0
  %v147 = vadd.f32 %v32, %v146
  %v148 = vpop.f32.mrb[0].mxu0
  %149 = vmatprep.mubr.f32.mxu0 0.0
  %150 = vmatmul.mubr.f32.gmra.mrb[0].mxu0 %v42
  %v151 = vpop.f32.mrb[0].mxu0
  %v152 = vadd.f32 %v32, %v151
  %v153 = vpop.f32.mrb[0].mxu0
  %154 = vmatprep.mubr.f32.mxu0 0.0
  %155 = vmatmul.mubr.f32.gmra.mrb[0].mxu0 %v45
  %v156 = vpop.f32.mrb[0].mxu0
  %v157 = vadd.f32 %v32, %v156
  %v158 = vpop.f32.mrb[0].mxu0
  %159 = vmatprep.mubr.f32.mxu0 0.0
  %160 = vmatmul.mubr.f32.gmra.mrb[0].mxu0 %v48
  %v161 = vpop.f32.mrb[0].mxu0
  %v162 = vadd.f32 %v32, %v161
  %v163 = vpop.f32.mrb[0].mxu0
  %164 = vmatprep.mubr.f32.mxu0 0.0
  %165 = vmatmul.mubr.f32.gmra.mrb[0].mxu0 %v51
  %v166 = vpop.f32.mrb[0].mxu0
  %v167 = vadd.f32 %v32, %v166
  %v168 = vpop.f32.mrb[0].mxu0
  %169 = vmatprep.mubr.f32.mxu0 0.0
  %170 = vmatmul.mubr.f32.gmra.mrb[0].mxu0 %v54
  %v171 = vpop.f32.mrb[0].mxu0
  %v172 = vadd.f32 %v32, %v171
  %v173 = vpop.f32.mrb[0].mxu0
  %174 = vmatprep.mubr.f32.mxu0 0.0
  %175 = vmatmul.mubr.f32.gmra.mrb[0].mxu0 %v57
  %v176 = vpop.f32.mrb[0].mxu0
  %v177 = vadd.f32 %v32, %v176
  %v178 = vpop.f32.mrb[0].mxu0
  %179 = vmatprep.mubr.f32.mxu0 0.0
  %180 = vmatmul.mubr.f32.gmra.mrb[0].mxu0 %v60
  %v181 = vpop.f32.mrb[0].mxu0
  %v182 = vadd.f32 %v32, %v181
  %v183 = vpop.f32.mrb[0].mxu0
  %184 = vmatprep.mubr.f32.mxu0 0.0
  %185 = vmatmul.mubr.f32.gmra.mrb[0].mxu0 %v63
  %v186 = vpop.f32.mrb[0].mxu0
  %v187 = vadd.f32 %v32, %v186
  %v188 = vpop.f32.mrb[0].mxu0
  %189 = vmatprep.mubr.f32.mxu0 0.0
  %190 = vmatmul.mubr.f32.gmra.mrb[0].mxu0 %v66
  %v191 = vpop.f32.mrb[0].mxu0
  %v192 = vadd.f32 %v32, %v191
  %v193 = vpop.f32.mrb[0].mxu0
  %194 = vmatprep.mubr.f32.mxu0 0.0
  %195 = vmatmul.mubr.f32.gmra.mrb[0].mxu0 %v69
  %v196 = vpop.f32.mrb[0].mxu0
  %v197 = vadd.f32 %v32, %v196
  %v198 = vpop.f32.mrb[0].mxu0
  %199 = vdwg.mxu0
  %vm200 = vcmask 64512
  %201 = vst.msk [vmem:[%s3] sm:$0xff] %vm200, %v142
  %202 = vst.msk [vmem:[%s3 + $0x8] sm:$0xff] %vm200, %v147
  %203 = vst.msk [vmem:[%s3 + $0x10] sm:$0xff] %vm200, %v152
  %204 = vst.msk [vmem:[%s3 + $0x18] sm:$0xff] %vm200, %v157
  %205 = vst.msk [vmem:[%s3 + $0x20] sm:$0xff] %vm200, %v162
  %206 = vst.msk [vmem:[%s3 + $0x28] sm:$0xff] %vm200, %v167
  %207 = vst.msk [vmem:[%s3 + $0x30] sm:$0xff] %vm200, %v172
  %208 = vst.msk [vmem:[%s3 + $0x38] sm:$0xff] %vm200, %v177
  %209 = vst.msk [vmem:[%s3 + $0x40] sm:$0xff] %vm200, %v182
  %210 = vst.msk [vmem:[%s3 + $0x48] sm:$0xff] %vm200, %v187
  %211 = vst.msk [vmem:[%s3 + $0x50] sm:$0xff] %vm200, %v192
  %212 = vst.msk [vmem:[%s3 + $0x58] sm:$0xff] %vm200, %v197
  // Predicated region
  $region14: #{tpu_custom_call.1} parent=0 // pred_check
    _
  $region15: #{tpu_custom_call.1} parent=0 // pred_check_branch
    %214 = sbr.rel (0) target = $region17
  $region16: #{tpu_custom_call.1} parent=0 // pred_region
    _
  $region17: #{tpu_custom_call.1} parent=0 // pred_fallthru
    _
  // Predicated region
  $region18: #{tpu_custom_call.1} parent=0 // pred_check
    _
  $region19: #{tpu_custom_call.1} parent=0 // pred_check_branch
    %216 = sbr.rel (0) target = $region21
  $region20: #{tpu_custom_call.1} parent=0 // pred_region
    _
  $region21: #{tpu_custom_call.1} parent=0 // pred_fallthru
    _

</llo_original>
